<compile_context>
chip_gen: v7x
topology: tpu7x:2x2x1
jax: 0.10.0
libtpu: 0.0.40
codegen_flags: <defaults>
</compile_context>

<pallas_src>
import functools

import numpy as np
import jax
import jax.numpy as jnp
from jax.experimental import pallas as pl
from jax.experimental.pallas import tpu as pltpu


# --------------------------------------------------------------------------- #
# helpers
# --------------------------------------------------------------------------- #
def _round_up(n, m):
    return ((n + m - 1) // m) * m


def _pick_tile(n, target=128):
    """Largest tile <= target that divides n and is a multiple of 8 (n is a multiple of 8)."""
    if n <= target:
        return n
    t = (target // 8) * 8
    while t > 8:
        if n % t == 0:
            return t
        t -= 8
    return 8


def _pick_kv_tile(n, target=256):
    """kv tile dividing n; prefer a multiple of 128 (lane-aligned bias blocks)."""
    if n <= target:
        return n
    t = (target // 128) * 128
    while t >= 128:
        if n % t == 0:
            return t
        t -= 128
    return _pick_tile(n, target)


def _nbytes(shape, dtype):
    c = 1
    for s in shape:
        c *= int(s)
    return c * np.dtype(dtype).itemsize


def _vmem_cap_bytes():
    """Physical VMEM per TensorCore (64 MiB on v7x, 128 MiB on v5e/v6e); conservative fallback."""
    try:
        if hasattr(pltpu, "get_tpu_info"):
            cap = int(getattr(pltpu.get_tpu_info(), "vmem_capacity_bytes", 0) or 0)
            if cap > 0:
                return cap
    except Exception:
        pass
    return 64 << 20


def _compiler_params(dims, need_bytes):
    cap = _vmem_cap_bytes()
    ceiling = (cap * 7) // 8                       # never request more than the chip has
    limit = int(min(ceiling, max(32 << 20, int(need_bytes) + (8 << 20))))
    limit = max(limit, 16 << 20)
    return pltpu.CompilerParams(dimension_semantics=dims, vmem_limit_bytes=limit)


def _bias_idx_weights(arr):
    """Index map for a (B|1, H|1, Np, Np) bias on the weights-path grid (b, qi, h)."""
    b_one = arr.shape[0] == 1
    h_one = arr.shape[1] == 1

    def idx(b, qi, h):
        return (0 if b_one else b, 0 if h_one else h, qi, 0)

    return idx


# --------------------------------------------------------------------------- #
# stage 1: fused QKV projection -> per-head (B, H, N, hd) layout (q pre-scaled via weights)
# --------------------------------------------------------------------------- #
def _qkv_proj_kernel(x_ref, w_ref, b_ref, q_ref, k_ref, v_ref, *, num_heads, head_dim):
    """x (1,TM,C); w (C,3C) transposed (q cols pre-scaled); b (1,3C) f32; q/k/v (1,H,TM,hd)."""
    C = num_heads * head_dim
    x = x_ref[0]                                                          # (TM, C)
    qkv = jnp.dot(x, w_ref[...], preferred_element_type=jnp.float32) + b_ref[...]   # (TM,3C) f32
    qkv = qkv.astype(q_ref.dtype)

    def split_heads(off):
        # bulk per-head gather + single whole-ref store (no per-head masked writeback loop)
        return jnp.stack(
            [qkv[:, off + h * head_dim: off + (h + 1) * head_dim] for h in range(num_heads)],
            axis=0)                                                       # (H, TM, hd)

    q_ref[0] = split_heads(0)
    k_ref[0] = split_heads(C)
    v_ref[0] = split_heads(2 * C)


def _qkv_projection(x, wqkv_t, bqkv, num_heads, head_dim, tile):
    B, Np, C = x.shape
    H, hd, TM = num_heads, head_dim, tile
    dt = x.dtype
    need = (2 * (_nbytes((1, TM, C), dt) + 3 * _nbytes((1, H, TM, hd), dt))
            + _nbytes((C, 3 * C), wqkv_t.dtype) + _nbytes((1, 3 * C), jnp.float32)
            + 2 * _nbytes((TM, 3 * C), jnp.float32))                      # live f32 GEMM result
    cost = pl.CostEstimate(
        flops=int(2 * B * Np * C * 3 * C),
        transcendentals=0,
        bytes_accessed=int(_nbytes(x.shape, dt) + _nbytes(wqkv_t.shape, wqkv_t.dtype)
                           + 3 * _nbytes((B, H, Np, hd), dt)))
    kernel = functools.partial(_qkv_proj_kernel, num_heads=H, head_dim=hd)
    return pl.pallas_call(
        kernel,
        out_shape=tuple(jax.ShapeDtypeStruct((B, H, Np, hd), dt) for _ in range(3)),
        grid_spec=pltpu.PrefetchScalarGridSpec(
            num_scalar_prefetch=0,
            grid=(B, Np // TM),
            in_specs=[
                pl.BlockSpec((1, TM, C), lambda b, i: (b, i, 0)),
                pl.BlockSpec((C, 3 * C), lambda b, i: (0, 0)),
                pl.BlockSpec((1, 3 * C), lambda b, i: (0, 0)),
            ],
            out_specs=[pl.BlockSpec((1, H, TM, hd), lambda b, i: (b, 0, i, 0))] * 3,
        ),
        compiler_params=_compiler_params(("parallel", "parallel"), need),
        cost_estimate=cost,
    )(x, wqkv_t, bqkv)


# --------------------------------------------------------------------------- #
# stage 2a: attention + fused output projection, attention weights returned
#            grid (B, N/TQ, H) -- one head per step, proj accumulated in f32 scratch
# --------------------------------------------------------------------------- #
def _attn_weights_kernel(q_ref, k_ref, v_ref, wp_ref, bp_ref, *rest,
                         head_dim, n_valid, seq_pad, wp_per_head, has_rpb, has_mask):
    refs = list(rest)
    rpb_ref = refs.pop(0) if has_rpb else None
    mask_ref = refs.pop(0) if has_mask else None
    out_ref, attn_ref, acc_sc = refs

    h = pl.program_id(2)
    q = q_ref[0, 0]                                       # (TQ, hd), softmax scale pre-folded
    k = k_ref[0, 0]                                       # (Np, hd)
    v = v_ref[0, 0]                                       # (Np, hd)

    s = jax.lax.dot_general(q, k, (((1,), (1,)), ((), ())),
                            preferred_element_type=jnp.float32)           # (TQ, Np) f32
    if has_rpb:
        s = s + rpb_ref[0, 0].astype(jnp.float32)
    if has_mask:
        s = s + mask_ref[0, 0].astype(jnp.float32)
    if n_valid < seq_pad:                                 # static: mask padded key columns
        col = jax.lax.broadcasted_iota(jnp.int32, s.shape, 1)
        s = jnp.where(col < n_valid, s, -1e30)

    m = jnp.max(s, axis=-1, keepdims=True)
    e = jnp.exp(s - m)
    l = jnp.sum(e, axis=-1, keepdims=True)
    p = e / l                                             # exact normalization (weights returned)
    attn_ref[0, 0] = p.astype(attn_ref.dtype)
    # TODO(synk): attn_drop / proj_drop omitted (eval mode, p = 0.0).

    o = jnp.dot(p.astype(v.dtype), v, preferred_element_type=jnp.float32)  # (TQ, hd)

    if wp_per_head:
        wp = wp_ref[...]                                  # (hd, C) rows of this head via BlockSpec
    else:
        wp = wp_ref[pl.ds(h * head_dim, head_dim), :]     # fallback when hd is not 8-aligned

    @pl.when(h == 0)
    def _():
        acc_sc[...] = jnp.zeros_like(acc_sc)

    acc_sc[...] += jnp.dot(o.astype(wp.dtype), wp, preferred_element_type=jnp.float32)

    @pl.when(h == pl.num_programs(2) - 1)
    def _():
        out_ref[0] = (acc_sc[...] + bp_ref[...]).astype(out_ref.dtype)


# --------------------------------------------------------------------------- #
# stage 2b: flash-style attention (online softmax), attention weights not returned
# --------------------------------------------------------------------------- #
def _attn_flash_kernel(q_ref, k_ref, v_ref, wp_ref, bp_ref, *rest,
                       num_heads, n_valid, seq_pad, kv_tile, has_mask):
    refs = list(rest)
    mask_ref = refs.pop(0) if has_mask else None
    out_ref, m_sc, l_sc, acc_sc = refs

    ki = pl.program_id(2)

    @pl.when(ki == 0)
    def _():
        m_sc[...] = jnp.full_like(m_sc, -1e30)
        l_sc[...] = jnp.zeros_like(l_sc)
        acc_sc[...] = jnp.zeros_like(acc_sc)

    q = q_ref[0]                                          # (H, TQ, hd), pre-scaled
    k = k_ref[0]                                          # (H, TK, hd)
    v = v_ref[0]                                          # (H, TK, hd)

    s = jnp.einsum("hqd,hkd->hqk", q, k, preferred_element_type=jnp.float32)   # (H, TQ, TK)
    if has_mask:
        s = s + mask_ref[0, 0].astype(jnp.float32)[None, :, :]   # broadcast mask over heads
    if n_valid < seq_pad:                                 # static: mask padded key columns
        col = jax.lax.broadcasted_iota(jnp.int32, s.shape, 2) + ki * kv_tile
        s = jnp.where(col < n_valid, s, -1e30)

    m_prev = m_sc[...]
    m_new = jnp.maximum(m_prev, jnp.max(s, axis=-1, keepdims=True))
    alpha = jnp.exp(m_prev - m_new)
    p = jnp.exp(s - m_new)
    l_sc[...] = alpha * l_sc[...] + jnp.sum(p, axis=-1, keepdims=True)
    acc_sc[...] = alpha * acc_sc[...] + jnp.einsum(
        "hqk,hkd->hqd", p.astype(v.dtype), v, preferred_element_type=jnp.float32)
    m_sc[...] = m_new

    @pl.when(ki == pl.num_programs(2) - 1)
    def _():
        o = acc_sc[...] * pl.reciprocal(l_sc[...], approx=True)     # (H, TQ, hd) f32
        # concat heads along lanes -> one C-deep projection matmul (full MXU depth)
        o_cat = jnp.concatenate([o[hh] for hh in range(num_heads)], axis=-1)   # (TQ, C)
        out_ref[0] = (jnp.dot(o_cat.astype(wp_ref.dtype), wp_ref[...],
                              preferred_element_type=jnp.float32)
                      + bp_ref[...]).astype(out_ref.dtype)


# --------------------------------------------------------------------------- #
# wrapper (self-attention path of Attention.forward; y=None)
# --------------------------------------------------------------------------- #
def attention_forward(x, params, num_heads, x_attn_mask=None, rpb=None,
                      use_flash_self_attn=False, attn_dtype=None,
                      q_tile=128, kv_tile=256):
    """Returns (x_out, None, attn); attn is None when use_flash_self_attn=True."""
    # TODO(synk): cross-attention path (y is not None) not implemented in Pallas.
    B, N, C = x.shape
    H = num_heads
    assert C % H == 0
    hd = C // H
    scale = hd ** -0.5
    dt = x.dtype
    attn_dtype = dt if attn_dtype is None else attn_dtype

    if use_flash_self_attn:
        assert rpb is None, "Relative position bias is not supported for flash attention"

    # --- pad sequence length to a multiple of 8; padded key columns masked in-kernel ---
    Np = max(8, _round_up(N, 8))
    if Np != N:
        x = jnp.pad(x, ((0, 0), (0, Np - N), (0, 0)))

    # --- weight prep: softmax scale folded into the q columns of the QKV projection ---
    qkv_w = params["qkv_w"].astype(jnp.float32)            # (3C, C)  nn.Linear layout
    qkv_b = params["qkv_b"].astype(jnp.float32)            # (3C,)
    q_scale = jnp.concatenate([jnp.full((C,), scale, jnp.float32),
                               jnp.ones((2 * C,), jnp.float32)])
    wqkv_t = (qkv_w * q_scale[:, None]).T.astype(dt)       # (C, 3C)
    bqkv = (qkv_b * q_scale).reshape(1, 3 * C).astype(jnp.float32)
    wproj_t = params["proj_w"].T.astype(dt)                # (C, C)
    bproj = params["proj_b"].reshape(1, C).astype(jnp.float32)

    TQ = _pick_tile(Np, q_tile)
    TK = _pick_kv_tile(Np, kv_tile)

    # Stage 1: fused QKV projection into per-head layout.
    # TODO(synk): the q projection could be fused into stage 2 to save one (B,N,C) HBM roundtrip.
    q, k, v = _qkv_projection(x, wqkv_t, bqkv, H, hd, TQ)

    # --- bias inputs kept separate, un-densified, and in f32 (no (B,H,N,N) zero tensor) ---
    rpb_a = None
    if rpb is not None:
        rpb_a = rpb if rpb.ndim == 4 else rpb[None]
        if Np != N:
            rpb_a = jnp.pad(rpb_a, ((0, 0), (0, 0), (0, Np - N), (0, Np - N)))
    mask_a = None
    if x_attn_mask is not None:
        mask_a = x_attn_mask if x_attn_mask.ndim == 4 else x_attn_mask[:, None]
        if Np != N:
            mask_a = jnp.pad(mask_a, ((0, 0), (0, 0), (0, Np - N), (0, Np - N)))

    if not use_flash_self_attn:
        # ---- attention-weights path (module default): one head per grid step ----
        nq = Np // TQ
        wp_per_head = (hd % 8 == 0) or (hd == C)
        if wp_per_head:
            wp_spec = pl.BlockSpec((hd, C), lambda b, qi, h: (h, 0))
        else:
            wp_spec = pl.BlockSpec((C, C), lambda b, qi, h: (0, 0))

        in_specs = [
            pl.BlockSpec((1, 1, TQ, hd), lambda b, qi, h: (b, h, qi, 0)),   # q tile (this head)
            pl.BlockSpec((1, 1, Np, hd), lambda b, qi, h: (b, h, 0, 0)),    # k (full kv, head)
            pl.BlockSpec((1, 1, Np, hd), lambda b, qi, h: (b, h, 0, 0)),    # v (full kv, head)
            wp_spec,                                                        # proj weight rows
            pl.BlockSpec((1, C), lambda b, qi, h: (0, 0)),                  # proj bias
        ]
        args = [q, k, v, wproj_t, bproj]
        if rpb_a is not None:
            in_specs.append(pl.BlockSpec((1, 1, TQ, Np), _bias_idx_weights(rpb_a)))
            args.append(rpb_a)
        if mask_a is not None:
            in_specs.append(pl.BlockSpec((1, 1, TQ, Np), _bias_idx_weights(mask_a)))
            args.append(mask_a)

        block_bytes = (_nbytes((TQ, hd), dt) + 2 * _nbytes((Np, hd), dt)
                       + _nbytes((hd if wp_per_head else C, C), dt)
                       + _nbytes((1, C), jnp.float32)
                       + _nbytes((TQ, C), dt) + _nbytes((TQ, Np), attn_dtype))
        if rpb_a is not None:
            block_bytes += _nbytes((TQ, Np), rpb_a.dtype)
        if mask_a is not None:
            block_bytes += _nbytes((TQ, Np), mask_a.dtype)
        need = (2 * block_bytes                              # double-buffered blocks
                + 3 * _nbytes((TQ, Np), jnp.float32)         # live f32 s/e/p intermediates
                + _nbytes((TQ, C), jnp.float32))             # projection accumulator

        cost = pl.CostEstimate(
            flops=int(4 * B * H * Np * Np * hd + 2 * B * Np * C * C),
            transcendentals=int(B * H * Np * Np),
            bytes_accessed=int(nq * 2 * _nbytes((B, H, Np, hd), dt)
                               + _nbytes((B, H, Np, hd), dt)
                               + _nbytes((B, Np, C), dt)
                               + _nbytes((B, H, Np, Np), attn_dtype)))

        kernel = functools.partial(_attn_weights_kernel, head_dim=hd, n_valid=N, seq_pad=Np,
                                   wp_per_head=wp_per_head,
                                   has_rpb=rpb_a is not None, has_mask=mask_a is not None)
        out, attn = pl.pallas_call(
            kernel,
            out_shape=(jax.ShapeDtypeStruct((B, Np, C), dt),
                       jax.ShapeDtypeStruct((B, H, Np, Np), attn_dtype)),
            grid_spec=pltpu.PrefetchScalarGridSpec(
                num_scalar_prefetch=0,
                grid=(B, nq, H),
                in_specs=in_specs,
                out_specs=[pl.BlockSpec((1, TQ, C), lambda b, qi, h: (b, qi, 0)),
                           pl.BlockSpec((1, 1, TQ, Np), lambda b, qi, h: (b, h, qi, 0))],
                scratch_shapes=[pltpu.VMEM((TQ, C), jnp.float32)],
            ),
            compiler_params=_compiler_params(("parallel", "parallel", "arbitrary"), need),
            cost_estimate=cost,
        )(*args)
        if Np != N:
            out = out[:, :N, :]
            attn = attn[:, :, :N, :N]
        return out, None, attn

    # ---- flash path (online softmax over kv tiles; attn weights not materialized) ----
    if mask_a is not None and TK % 128 != 0 and TK != Np:
        TK = Np        # mask block's last dim must be lane-aligned or full
    nq, nk = Np // TQ, Np // TK

    # TODO(synk): on v5e, pipeline_mode=pl.Buffered(3) on the k/v BlockSpecs can hide exposed DMA.
    in_specs = [
        pl.BlockSpec((1, H, TQ, hd), lambda b, qi, ki: (b, 0, qi, 0)),
        pl.BlockSpec((1, H, TK, hd), lambda b, qi, ki: (b, 0, ki, 0)),
        pl.BlockSpec((1, H, TK, hd), lambda b, qi, ki: (b, 0, ki, 0)),
        pl.BlockSpec((C, C), lambda b, qi, ki: (0, 0)),
        pl.BlockSpec((1, C), lambda b, qi, ki: (0, 0)),
    ]
    args = [q, k, v, wproj_t, bproj]
    if mask_a is not None:
        b_one = mask_a.shape[0] == 1
        in_specs.append(pl.BlockSpec((1, 1, TQ, TK),
                                     lambda b, qi, ki: (0 if b_one else b, 0, qi, ki)))
        args.append(mask_a)

    block_bytes = (_nbytes((H, TQ, hd), dt) + 2 * _nbytes((H, TK, hd), dt)
                   + _nbytes((C, C), dt) + _nbytes((1, C), jnp.float32) + _nbytes((TQ, C), dt))
    if mask_a is not None:
        block_bytes += _nbytes((TQ, TK), mask_a.dtype)
    need = (2 * block_bytes
            + 3 * _nbytes((H, TQ, TK), jnp.float32)          # live f32 s/p intermediates
            + 2 * _nbytes((H, TQ, 1), jnp.float32) + _nbytes((H, TQ, hd), jnp.float32))

    cost = pl.CostEstimate(
        flops=int(4 * B * H * Np * Np * hd + 2 * B * Np * C * C),
        transcendentals=int(B * H * Np * Np),
        bytes_accessed=int(_nbytes((B, H, Np, hd), dt) * (1 + 2 * nq)
                           + _nbytes((B, Np, C), dt)))

    kernel = functools.partial(_attn_flash_kernel, num_heads=H, n_valid=N, seq_pad=Np,
                               kv_tile=TK, has_mask=mask_a is not None)
    out = pl.pallas_call(
        kernel,
        out_shape=jax.ShapeDtypeStruct((B, Np, C), dt),
        grid_spec=pltpu.PrefetchScalarGridSpec(
            num_scalar_prefetch=0,
            grid=(B, nq, nk),
            in_specs=in_specs,
            out_specs=pl.BlockSpec((1, TQ, C), lambda b, qi, ki: (b, qi, 0)),
            scratch_shapes=[pltpu.VMEM((H, TQ, 1), jnp.float32),
                            pltpu.VMEM((H, TQ, 1), jnp.float32),
                            pltpu.VMEM((H, TQ, hd), jnp.float32)],
        ),
        compiler_params=_compiler_params(("parallel", "parallel", "arbitrary"), need),
        cost_estimate=cost,
    )(*args)
    if Np != N:
        out = out[:, :N, :]
    return out, None, None


# --------------------------------------------------------------------------- #
# pure-JAX reference mirroring the PyTorch module (eval mode)
# --------------------------------------------------------------------------- #
def _reference_forward(x, params, num_heads, x_attn_mask=None, rpb=None):
    B, N, C = x.shape
    hd = C // num_heads
    scale = hd ** -0.5
    qkv = x @ params["qkv_w"].T + params["qkv_b"]
    qkv = qkv.reshape(B, N, 3, num_heads, hd).transpose(2, 0, 3, 1, 4)
    q, k, v = qkv[0], qkv[1], qkv[2]
    attn = jnp.einsum("bhnd,bhmd->bhnm", q, k) * scale
    if rpb is not None:
        attn = attn + rpb
    if x_attn_mask is not None:
        attn = attn + x_attn_mask
    attn = jax.nn.softmax(attn, axis=-1)
    o = jnp.einsum("bhnm,bhmd->bhnd", attn, v)
    o = o.transpose(0, 2, 1, 3).reshape(B, N, C)
    out = o @ params["proj_w"].T + params["proj_b"]
    return out, attn


if __name__ == "__main__":
    B, N, C = 2, 8, 32
    num_heads = 4

    key = jax.random.PRNGKey(0)
    k_x, k_qw, k_qb, k_pw, k_pb, k_rpb = jax.random.split(key, 6)

    x = jax.random.normal(k_x, (B, N, C), dtype=jnp.float32)
    params = {
        "qkv_w": 0.1 * jax.random.normal(k_qw, (3 * C, C), dtype=jnp.float32),  # nn.Linear(C, 3C)
        "qkv_b": 0.1 * jax.random.normal(k_qb, (3 * C,), dtype=jnp.float32),    # qkv_bias=True
        "proj_w": 0.1 * jax.random.normal(k_pw, (C, C), dtype=jnp.float32),     # nn.Linear(C, C)
        "proj_b": 0.1 * jax.random.normal(k_pb, (C,), dtype=jnp.float32),
    }
    rpb = 0.5 * jax.random.normal(k_rpb, (B, num_heads, N, N), dtype=jnp.float32)
    mask = jnp.zeros((B, 1, N, N), jnp.float32).at[:, :, :, -2:].set(-1e9)

    TOL = dict(atol=5e-3, rtol=5e-3)

    # 1) default path, no bias
    out, y_out, attn = attention_forward(x, params, num_heads)
    out, attn = jax.block_until_ready((out, attn))
    ref_out, ref_attn = _reference_forward(x, params, num_heads)
    assert y_out is None and out.shape == (B, N, C) and attn.shape == (B, num_heads, N, N)
    assert jnp.allclose(out, ref_out, **TOL)
    assert jnp.allclose(attn, ref_attn, **TOL)

    # 2) default path with rpb + additive attention mask
    out2, _, attn2 = attention_forward(x, params, num_heads, x_attn_mask=mask, rpb=rpb)
    out2, attn2 = jax.block_until_ready((out2, attn2))
    ref_out2, ref_attn2 = _reference_forward(x, params, num_heads, x_attn_mask=mask, rpb=rpb)
    assert jnp.allclose(out2, ref_out2, **TOL)
    assert jnp.allclose(attn2, ref_attn2, **TOL)

    # 3) flash path with mask (attn weights not returned, matching use_flash_self_attn=True)
    out3, _, attn3 = attention_forward(x, params, num_heads, x_attn_mask=mask,
                                       use_flash_self_attn=True)
    out3 = jax.block_until_ready(out3)
    ref_out3, _ = _reference_forward(x, params, num_heads, x_attn_mask=mask)
    assert attn3 is None and jnp.allclose(out3, ref_out3, **TOL)

    # 4) flash path, no mask
    out4, _, _ = attention_forward(x, params, num_heads, use_flash_self_attn=True)
    out4 = jax.block_until_ready(out4)
    assert jnp.allclose(out4, ref_out, **TOL)

    # 5) bf16 inputs -> bf16 MXU operands (f32 accumulation), bf16 attn writeback
    out5, _, attn5 = attention_forward(x.astype(jnp.bfloat16), params, num_heads)
    out5, attn5 = jax.block_until_ready((out5, attn5))
    assert out5.dtype == jnp.bfloat16 and attn5.dtype == jnp.bfloat16
    assert jnp.allclose(out5.astype(jnp.float32), ref_out, atol=6e-2, rtol=6e-2)
    assert jnp.allclose(attn5.astype(jnp.float32), ref_attn, atol=6e-2, rtol=6e-2)

    print("KERNEL_OK")
</pallas_src>

<mosaic_0001>
module attributes {stable_mosaic.version = 11 : i64} {
  func.func @_qkv_proj_kernel(%arg0: i32, %arg1: i32, %arg2: memref<1x8x32xf32, #tpu.memory_space<vmem>>, %arg3: memref<32x96xf32, #tpu.memory_space<vmem>>, %arg4: memref<1x96xf32, #tpu.memory_space<vmem>>, %arg5: memref<1x4x8x8xf32, #tpu.memory_space<vmem>>, %arg6: memref<1x4x8x8xf32, #tpu.memory_space<vmem>>, %arg7: memref<1x4x8x8xf32, #tpu.memory_space<vmem>>) attributes {dimension_semantics = [#tpu.dimension_semantics<parallel>, #tpu.dimension_semantics<parallel>], iteration_bounds = array<i64: 2, 1>, scalar_prefetch = 0 : i64, scratch_operands = 0 : i64, tpu.core_type = #tpu.core_type<tc>, window_params = [{transform_indices = @transform_0, window_bounds = array<i64: 1, 8, 32>}, {pipeline_mode = #tpu.pipeline_mode<synchronous>, transform_indices = @transform_1, window_bounds = array<i64: 32, 96>}, {pipeline_mode = #tpu.pipeline_mode<synchronous>, transform_indices = @transform_2, window_bounds = array<i64: 1, 96>}, {transform_indices = @transform_3, window_bounds = array<i64: 1, 4, 8, 8>}, {transform_indices = @transform_4, window_bounds = array<i64: 1, 4, 8, 8>}, {transform_indices = @transform_5, window_bounds = array<i64: 1, 4, 8, 8>}]} {
    %c0 = arith.constant 0 : index
    %c0_0 = arith.constant 0 : index
    %c0_1 = arith.constant 0 : index
    %0 = vector.load %arg2[%c0, %c0_0, %c0_1] : memref<1x8x32xf32, #tpu.memory_space<vmem>>, vector<1x8x32xf32>
    %1 = vector.shape_cast %0 : vector<1x8x32xf32> to vector<8x32xf32>
    %c0_2 = arith.constant 0 : index
    %c0_3 = arith.constant 0 : index
    %2 = vector.load %arg3[%c0_2, %c0_3] : memref<32x96xf32, #tpu.memory_space<vmem>>, vector<32x96xf32>
    %cst = arith.constant dense<0.000000e+00> : vector<8x96xf32>
    %3 = tpu.matmul %1, %2, %cst {dimension_numbers = #tpu.dot_dimension_numbers<[1], [0], [0], [1], [0, 0, 1, 1], [], []>} : vector<8x32xf32>, vector<32x96xf32>, vector<8x96xf32> -> vector<8x96xf32>
    %c0_4 = arith.constant 0 : index
    %c0_5 = arith.constant 0 : index
    %4 = vector.load %arg4[%c0_4, %c0_5] : memref<1x96xf32, #tpu.memory_space<vmem>>, vector<1x96xf32>
    %5 = vector.broadcast %4 : vector<1x96xf32> to vector<8x96xf32>
    %6 = arith.addf %3, %5 : vector<8x96xf32>
    %7 = vector.extract_strided_slice %6 {offsets = [0, 0], sizes = [8, 8], strides = [1, 1]} : vector<8x96xf32> to vector<8x8xf32>
    %8 = vector.extract_strided_slice %6 {offsets = [0, 8], sizes = [8, 8], strides = [1, 1]} : vector<8x96xf32> to vector<8x8xf32>
    %9 = vector.extract_strided_slice %6 {offsets = [0, 16], sizes = [8, 8], strides = [1, 1]} : vector<8x96xf32> to vector<8x8xf32>
    %10 = vector.extract_strided_slice %6 {offsets = [0, 24], sizes = [8, 8], strides = [1, 1]} : vector<8x96xf32> to vector<8x8xf32>
    %11 = vector.shape_cast %7 : vector<8x8xf32> to vector<1x8x8xf32>
    %12 = vector.shape_cast %8 : vector<8x8xf32> to vector<1x8x8xf32>
    %13 = vector.shape_cast %9 : vector<8x8xf32> to vector<1x8x8xf32>
    %14 = vector.shape_cast %10 : vector<8x8xf32> to vector<1x8x8xf32>
    %15 = tpu.concatenate %11, %12, %13, %14 in 0 : vector<1x8x8xf32>, vector<1x8x8xf32>, vector<1x8x8xf32>, vector<1x8x8xf32> -> vector<4x8x8xf32>
    %c0_6 = arith.constant 0 : index
    %c0_7 = arith.constant 0 : index
    %c0_8 = arith.constant 0 : index
    %c0_9 = arith.constant 0 : index
    %16 = vector.load %arg5[%c0_6, %c0_7, %c0_8, %c0_9] : memref<1x4x8x8xf32, #tpu.memory_space<vmem>>, vector<1x4x8x8xf32>
    %17 = vector.shape_cast %16 : vector<1x4x8x8xf32> to vector<4x8x8xf32>
    %18 = vector.shape_cast %15 : vector<4x8x8xf32> to vector<1x4x8x8xf32>
    tpu.vector_store %arg5[%c0_6, %c0_7, %c0_8, %c0_9], %18 {strides = array<i32>} : memref<1x4x8x8xf32, #tpu.memory_space<vmem>>, vector<1x4x8x8xf32>,
    %19 = vector.extract_strided_slice %6 {offsets = [0, 32], sizes = [8, 8], strides = [1, 1]} : vector<8x96xf32> to vector<8x8xf32>
    %20 = vector.extract_strided_slice %6 {offsets = [0, 40], sizes = [8, 8], strides = [1, 1]} : vector<8x96xf32> to vector<8x8xf32>
    %21 = vector.extract_strided_slice %6 {offsets = [0, 48], sizes = [8, 8], strides = [1, 1]} : vector<8x96xf32> to vector<8x8xf32>
    %22 = vector.extract_strided_slice %6 {offsets = [0, 56], sizes = [8, 8], strides = [1, 1]} : vector<8x96xf32> to vector<8x8xf32>
    %23 = vector.shape_cast %19 : vector<8x8xf32> to vector<1x8x8xf32>
    %24 = vector.shape_cast %20 : vector<8x8xf32> to vector<1x8x8xf32>
    %25 = vector.shape_cast %21 : vector<8x8xf32> to vector<1x8x8xf32>
    %26 = vector.shape_cast %22 : vector<8x8xf32> to vector<1x8x8xf32>
    %27 = tpu.concatenate %23, %24, %25, %26 in 0 : vector<1x8x8xf32>, vector<1x8x8xf32>, vector<1x8x8xf32>, vector<1x8x8xf32> -> vector<4x8x8xf32>
    %c0_10 = arith.constant 0 : index
    %c0_11 = arith.constant 0 : index
    %c0_12 = arith.constant 0 : index
    %c0_13 = arith.constant 0 : index
    %28 = vector.load %arg6[%c0_10, %c0_11, %c0_12, %c0_13] : memref<1x4x8x8xf32, #tpu.memory_space<vmem>>, vector<1x4x8x8xf32>
    %29 = vector.shape_cast %28 : vector<1x4x8x8xf32> to vector<4x8x8xf32>
    %30 = vector.shape_cast %27 : vector<4x8x8xf32> to vector<1x4x8x8xf32>
    tpu.vector_store %arg6[%c0_10, %c0_11, %c0_12, %c0_13], %30 {strides = array<i32>} : memref<1x4x8x8xf32, #tpu.memory_space<vmem>>, vector<1x4x8x8xf32>,
    %31 = vector.extract_strided_slice %6 {offsets = [0, 64], sizes = [8, 8], strides = [1, 1]} : vector<8x96xf32> to vector<8x8xf32>
    %32 = vector.extract_strided_slice %6 {offsets = [0, 72], sizes = [8, 8], strides = [1, 1]} : vector<8x96xf32> to vector<8x8xf32>
    %33 = vector.extract_strided_slice %6 {offsets = [0, 80], sizes = [8, 8], strides = [1, 1]} : vector<8x96xf32> to vector<8x8xf32>
    %34 = vector.extract_strided_slice %6 {offsets = [0, 88], sizes = [8, 8], strides = [1, 1]} : vector<8x96xf32> to vector<8x8xf32>
    %35 = vector.shape_cast %31 : vector<8x8xf32> to vector<1x8x8xf32>
    %36 = vector.shape_cast %32 : vector<8x8xf32> to vector<1x8x8xf32>
    %37 = vector.shape_cast %33 : vector<8x8xf32> to vector<1x8x8xf32>
    %38 = vector.shape_cast %34 : vector<8x8xf32> to vector<1x8x8xf32>
    %39 = tpu.concatenate %35, %36, %37, %38 in 0 : vector<1x8x8xf32>, vector<1x8x8xf32>, vector<1x8x8xf32>, vector<1x8x8xf32> -> vector<4x8x8xf32>
    %c0_14 = arith.constant 0 : index
    %c0_15 = arith.constant 0 : index
    %c0_16 = arith.constant 0 : index
    %c0_17 = arith.constant 0 : index
    %40 = vector.load %arg7[%c0_14, %c0_15, %c0_16, %c0_17] : memref<1x4x8x8xf32, #tpu.memory_space<vmem>>, vector<1x4x8x8xf32>
    %41 = vector.shape_cast %40 : vector<1x4x8x8xf32> to vector<4x8x8xf32>
    %42 = vector.shape_cast %39 : vector<4x8x8xf32> to vector<1x4x8x8xf32>
    tpu.vector_store %arg7[%c0_14, %c0_15, %c0_16, %c0_17], %42 {strides = array<i32>} : memref<1x4x8x8xf32, #tpu.memory_space<vmem>>, vector<1x4x8x8xf32>,
    return
  }
  func.func @transform_0(%arg0: i32, %arg1: i32) -> (i32, i32, i32) {
    %c0_i32 = arith.constant 0 : i32
    %c0_i32_0 = arith.constant 0 : i32
    return %arg0, %arg1, %c0_i32 : i32, i32, i32
  }
  func.func @transform_1(%arg0: i32, %arg1: i32) -> (i32, i32) {
    %c0_i32 = arith.constant 0 : i32
    %c0_i32_0 = arith.constant 0 : i32
    %c0_i32_1 = arith.constant 0 : i32
    return %c0_i32, %c0_i32_0 : i32, i32
  }
  func.func @transform_2(%arg0: i32, %arg1: i32) -> (i32, i32) {
    %c0_i32 = arith.constant 0 : i32
    %c0_i32_0 = arith.constant 0 : i32
    %c0_i32_1 = arith.constant 0 : i32
    return %c0_i32, %c0_i32_0 : i32, i32
  }
  func.func @transform_3(%arg0: i32, %arg1: i32) -> (i32, i32, i32, i32) {
    %c0_i32 = arith.constant 0 : i32
    %c0_i32_0 = arith.constant 0 : i32
    %c0_i32_1 = arith.constant 0 : i32
    return %arg0, %c0_i32, %arg1, %c0_i32_0 : i32, i32, i32, i32
  }
  func.func @transform_4(%arg0: i32, %arg1: i32) -> (i32, i32, i32, i32) {
    %c0_i32 = arith.constant 0 : i32
    %c0_i32_0 = arith.constant 0 : i32
    %c0_i32_1 = arith.constant 0 : i32
    return %arg0, %c0_i32, %arg1, %c0_i32_0 : i32, i32, i32, i32
  }
  func.func @transform_5(%arg0: i32, %arg1: i32) -> (i32, i32, i32, i32) {
    %c0_i32 = arith.constant 0 : i32
    %c0_i32_0 = arith.constant 0 : i32
    %c0_i32_1 = arith.constant 0 : i32
    return %arg0, %c0_i32, %arg1, %c0_i32_0 : i32, i32, i32, i32
  }
}

</mosaic_0001>

<llo_original>
// kernel: tpu_custom_call.1
$region0: #{tpu_custom_call.1}
  #allocation0 [shape = 'u32[]', space=smem, size = 0x4, offset = 0x4, fixed_abs, tag = 'smem constant byte address 0x4 - core index']
  #allocation1 [shape = 'u32[144,128]{1,0:T(1,128)}', space=vmem, size = 0x12000, scoped, tag = 'internal scratch']
  %s0 = inlined_call_operand.hbm [shape: f32[2,8,32], index: 0, kind: input, shape index: {}]
  %s1 = inlined_call_operand.hbm [shape: f32[32,96], index: 1, kind: input, shape index: {}]
  %s2 = inlined_call_operand.vmem [shape: f32[1,96], index: 2, kind: input, shape index: {}]
  %s3 = inlined_call_operand.hbm [shape: f32[2,4,8,8], index: 3, kind: output, shape index: {0}]
  %s4 = inlined_call_operand.hbm [shape: f32[2,4,8,8], index: 4, kind: output, shape index: {1}]
  %s5 = inlined_call_operand.hbm [shape: f32[2,4,8,8], index: 5, kind: output, shape index: {2}]
  %6 = xla_tuple %s3, %s4, %s5
  %s7 = sld [smem:[#allocation0]]
  $region69: #{tpu_custom_call.1} parent=0
    _
  %s9 = ssub.s32 1, %s7
  %s10 = scalar_select 0, %s9, %s7
  $region1: #{tpu_custom_call.1} parent=0
    #allocation2 [shape = 'u8[8192]{0}', space=vmem, size = 0x2000, scoped, tag = 'input window, operand 0']
    #allocation3 [shape = 's32[2]{0}', space=sflag, size = 0x8, scoped, tag = 'scoped memory for tpu_custom_call.1']
    #allocation4 [shape = 's32[2]{0}', space=sflag, size = 0x8, scoped, tag = 'scoped memory for tpu_custom_call.1']
    #allocation5 [shape = 'u8[16384]{0}', space=vmem, size = 0x4000, scoped, tag = 'input window, operand 1, single buffered']
    #allocation6 [shape = 's32[1]{0}', space=sflag, size = 0x4, scoped, tag = 'scoped memory for tpu_custom_call.1']
    #allocation7 [shape = 'u8[32768]{0}', space=vmem, size = 0x8000, scoped, tag = 'output window, operand 0']
    #allocation8 [shape = 'u8[32768]{0}', space=vmem, size = 0x8000, scoped, tag = 'output window, operand 1']
    #allocation9 [shape = 's32[2]{0}', space=sflag, size = 0x8, scoped, tag = 'scoped memory for tpu_custom_call.1']
    #allocation10 [shape = 'u8[32768]{0}', space=vmem, size = 0x8000, scoped, tag = 'output window, operand 2']
    %11 = vsyncpa [#allocation3], 0
    %s12 = scalar_lea.sflag [#allocation3], 1
    %13 = vsyncpa %s12, 0
    %14 = vsyncpa [#allocation6], 0
    %15 = vsyncpa [#allocation4], 0
    %s16 = scalar_lea.sflag [#allocation4], 1
    %17 = vsyncpa %s16, 0
    %18 = vsyncpa [#allocation9], 0
    %s19 = scalar_lea.sflag [#allocation9], 1
    %20 = vsyncpa %s19, 0
    loop: start=0, step=1, limit=4
    $region2: #{tpu_custom_call.1} parent=1 // loop_pre_header
      _
    $region3: #{tpu_custom_call.1} parent=1 // loop_header
      %s22 = sphi 0, %s26
      %p23 = scmp.ge.s32.totalorder %s22, 4
      %s29 = sphi 0, %s41
      %s30 = sphi 0, %s37
      %s31 = sphi 0, %s29
      %s32 = sphi 0, %s30
      %s33 = sphi 0, %s31
      %s34 = sphi 0, %s32
      %s46 = sphi 0, %s48
      %s49 = sphi 0, %s46
      %s50 = sphi 0, %s49
      %s66 = sphi 0, %s50
      %s70 = sphi 0, %s70
      %s72 = sphi 0, %s70
      %s73 = sphi 0, %s72
      %s87 = sphi 0, %s73
      %s91 = sphi 0, %s91
      %s93 = sphi 0, %s91
      %s94 = sphi 0, %s93
      %s108 = sphi 0, %s94
      %s116 = sphi 0, %s118
      %s119 = sphi 0, %s116
      %s120 = sphi 0, %s119
      %s136 = sphi 0, %s120
      %s144 = sphi 0, %s146
      %s147 = sphi 0, %s144
      %s148 = sphi 0, %s147
      %s164 = sphi 0, %s148
      %s172 = sphi 0, %s174
      %s175 = sphi 0, %s172
      %s176 = sphi 0, %s175
      %s192 = sphi 0, %s176
    $region4: #{tpu_custom_call.1} parent=1 // loop_header_branch
      %25 = sbr.rel (%p23) target = $region8
    $region5: #{tpu_custom_call.1} parent=1 // loop_body
      %s27 = ssub.s32 %s22, 1
      %s28 = ssub.s32 %s22, 2
      %s35 = sadd.s32 1, %s30
      %p36 = scmp.ge.s32.totalorder %s35, 1
      %s37 = scalar_select %p36, 0, %s35
      %s38 = sadd.s32 1, %s29
      %s39 = scalar_select %p36, %s38, %s29
      %p40 = scmp.ge.s32.totalorder %s39, 2
      %s41 = scalar_select %p40, 0, %s39
      %s42 = ssub.s32 %s29, %s41
      %s43 = ssub.s32 %s30, %s37
      %s44 = sor.u32 %s42, %s43
      %p45 = scmp.eq.s32.totalorder %s44, 0
      %s47 = sadd.s32 %s46, 1
      %s48 = scalar_select %p45, %s46, %s47
      %p51 = pneg %p45
      %p52 = scmp.eq.s32.totalorder %s22, 1
      %p53 = por %p51, %p52
      %p54 = scmp.ne.s32.totalorder %s46, %s49
      %p55 = scmp.eq.s32.totalorder %s22, 0
      %p56 = por %p54, %p55
      %p57 = scmp.ne.s32.totalorder %s46, %s49
      %p58 = scmp.eq.s32.totalorder %s27, 1
      %p59 = por %p57, %p58
      %p60 = scmp.ne.s32.totalorder %s49, %s50
      %p61 = scmp.eq.s32.totalorder %s27, 0
      %p62 = por %p60, %p61
      %p63 = scmp.ne.s32.totalorder %s49, %s50
      %p64 = scmp.eq.s32.totalorder %s28, 1
      %p65 = por %p63, %p64
      %p67 = scmp.ne.s32.totalorder %s50, %s66
      %p68 = scmp.eq.s32.totalorder %s28, 0
      %p69 = por %p67, %p68
      %s71 = sadd.s32 %s70, 1
      %p74 = scmp.eq.s32.totalorder %s22, 1
      %p75 = scmp.ne.s32.totalorder %s70, %s72
      %p76 = scmp.eq.s32.totalorder %s22, 0
      %p77 = por %p75, %p76
      %p78 = scmp.ne.s32.totalorder %s70, %s72
      %p79 = scmp.eq.s32.totalorder %s27, 1
      %p80 = por %p78, %p79
      %p81 = scmp.ne.s32.totalorder %s72, %s73
      %p82 = scmp.eq.s32.totalorder %s27, 0
      %p83 = por %p81, %p82
      %p84 = scmp.ne.s32.totalorder %s72, %s73
      %p85 = scmp.eq.s32.totalorder %s28, 1
      %p86 = por %p84, %p85
      %p88 = scmp.ne.s32.totalorder %s73, %s87
      %p89 = scmp.eq.s32.totalorder %s28, 0
      %p90 = por %p88, %p89
      %s92 = sadd.s32 %s91, 1
      %p95 = scmp.eq.s32.totalorder %s22, 1
      %p96 = scmp.ne.s32.totalorder %s91, %s93
      %p97 = scmp.eq.s32.totalorder %s22, 0
      %p98 = por %p96, %p97
      %p99 = scmp.ne.s32.totalorder %s91, %s93
      %p100 = scmp.eq.s32.totalorder %s27, 1
      %p101 = por %p99, %p100
      %p102 = scmp.ne.s32.totalorder %s93, %s94
      %p103 = scmp.eq.s32.totalorder %s27, 0
      %p104 = por %p102, %p103
      %p105 = scmp.ne.s32.totalorder %s93, %s94
      %p106 = scmp.eq.s32.totalorder %s28, 1
      %p107 = por %p105, %p106
      %p109 = scmp.ne.s32.totalorder %s94, %s108
      %p110 = scmp.eq.s32.totalorder %s28, 0
      %p111 = por %p109, %p110
      %s112 = ssub.s32 %s29, %s41
      %s113 = ssub.s32 %s30, %s37
      %s114 = sor.u32 %s112, %s113
      %p115 = scmp.eq.s32.totalorder %s114, 0
      %s117 = sadd.s32 %s116, 1
      %s118 = scalar_select %p115, %s116, %s117
      %p121 = pneg %p115
      %p122 = scmp.eq.s32.totalorder %s22, 1
      %p123 = por %p121, %p122
      %p124 = scmp.ne.s32.totalorder %s116, %s119
      %p125 = scmp.eq.s32.totalorder %s22, 0
      %p126 = por %p124, %p125
      %p127 = scmp.ne.s32.totalorder %s116, %s119
      %p128 = scmp.eq.s32.totalorder %s27, 1
      %p129 = por %p127, %p128
      %p130 = scmp.ne.s32.totalorder %s119, %s120
      %p131 = scmp.eq.s32.totalorder %s27, 0
      %p132 = por %p130, %p131
      %p133 = scmp.ne.s32.totalorder %s119, %s120
      %p134 = scmp.eq.s32.totalorder %s28, 1
      %p135 = por %p133, %p134
      %p137 = scmp.ne.s32.totalorder %s120, %s136
      %p138 = scmp.eq.s32.totalorder %s28, 0
      %p139 = por %p137, %p138
      %s140 = ssub.s32 %s29, %s41
      %s141 = ssub.s32 %s30, %s37
      %s142 = sor.u32 %s140, %s141
      %p143 = scmp.eq.s32.totalorder %s142, 0
      %s145 = sadd.s32 %s144, 1
      %s146 = scalar_select %p143, %s144, %s145
      %p149 = pneg %p143
      %p150 = scmp.eq.s32.totalorder %s22, 1
      %p151 = por %p149, %p150
      %p152 = scmp.ne.s32.totalorder %s144, %s147
      %p153 = scmp.eq.s32.totalorder %s22, 0
      %p154 = por %p152, %p153
      %p155 = scmp.ne.s32.totalorder %s144, %s147
      %p156 = scmp.eq.s32.totalorder %s27, 1
      %p157 = por %p155, %p156
      %p158 = scmp.ne.s32.totalorder %s147, %s148
      %p159 = scmp.eq.s32.totalorder %s27, 0
      %p160 = por %p158, %p159
      %p161 = scmp.ne.s32.totalorder %s147, %s148
      %p162 = scmp.eq.s32.totalorder %s28, 1
      %p163 = por %p161, %p162
      %p165 = scmp.ne.s32.totalorder %s148, %s164
      %p166 = scmp.eq.s32.totalorder %s28, 0
      %p167 = por %p165, %p166
      %s168 = ssub.s32 %s29, %s41
      %s169 = ssub.s32 %s30, %s37
      %s170 = sor.u32 %s168, %s169
      %p171 = scmp.eq.s32.totalorder %s170, 0
      %s173 = sadd.s32 %s172, 1
      %s174 = scalar_select %p171, %s172, %s173
      %p177 = pneg %p171
      %p178 = scmp.eq.s32.totalorder %s22, 1
      %p179 = por %p177, %p178
      %p180 = scmp.ne.s32.totalorder %s172, %s175
      %p181 = scmp.eq.s32.totalorder %s22, 0
      %p182 = por %p180, %p181
      %p183 = scmp.ne.s32.totalorder %s172, %s175
      %p184 = scmp.eq.s32.totalorder %s27, 1
      %p185 = por %p183, %p184
      %p186 = scmp.ne.s32.totalorder %s175, %s176
      %p187 = scmp.eq.s32.totalorder %s27, 0
      %p188 = por %p186, %p187
      %p189 = scmp.ne.s32.totalorder %s175, %s176
      %p190 = scmp.eq.s32.totalorder %s28, 1
      %p191 = por %p189, %p190
      %p193 = scmp.ne.s32.totalorder %s176, %s192
      %p194 = scmp.eq.s32.totalorder %s28, 0
      %p195 = por %p193, %p194
      %p196 = scmp.le.s32.totalorder 1, %s22
      %p197 = scmp.lt.s32.totalorder %s22, 3
      %p198 = pnand %p196, %p197
      %p199 = pneg %p198
      // Predicated region
      $region9: #{tpu_custom_call.1} parent=5 // pred_check
        _
      $region10: #{tpu_custom_call.1} parent=5 // pred_check_branch
        %201 = sbr.rel (%p198) target = $region12
      $region11: #{tpu_custom_call.1} parent=5 // pred_region
        %s202 = ssub.s32 %s22, 1
        // Predicated region
        $region13: #{tpu_custom_call.1} parent=11 // pred_check
          %p203 = pneg %p83
        $region14: #{tpu_custom_call.1} parent=11 // pred_check_branch
          %205 = sbr.rel (%p203) target = $region16
        $region15: #{tpu_custom_call.1} parent=11 // pred_region
          %s207 = ssub.s32 512, 512
          %208 = vsyncadd [#allocation6], %s207
          %s209 = sshll.u32 [#allocation5], 4
          %s210 = int_to_ptr.vmem [resolvable:$true] %s209
          %215 = dma.hbm_to_vmem [thread:$0]  %s1, 512, %s210, [#allocation6], 128, 128, 8
        $region16: #{tpu_custom_call.1} parent=11 // pred_fallthru
          _
        // Predicated region
        $region17: #{tpu_custom_call.1} parent=11 // pred_check
          %p216 = pneg %p104
        $region18: #{tpu_custom_call.1} parent=11 // pred_check_branch
          %218 = sbr.rel (%p216) target = $region20
        $region19: #{tpu_custom_call.1} parent=11 // pred_region
          _
        $region20: #{tpu_custom_call.1} parent=11 // pred_fallthru
          _
      $region12: #{tpu_custom_call.1} parent=5 // pred_fallthru
        _
      %p219 = scmp.lt.s32.totalorder %s22, 2
      // Predicated region
      $region21: #{tpu_custom_call.1} parent=5 // pred_check
        %p220 = pneg %p219
      $region22: #{tpu_custom_call.1} parent=5 // pred_check_branch
        %222 = sbr.rel (%p220) target = $region24
      $region23: #{tpu_custom_call.1} parent=5 // pred_region
        // Predicated region
        $region25: #{tpu_custom_call.1} parent=23 // pred_check
          %p223 = pneg %p56
        $region26: #{tpu_custom_call.1} parent=23 // pred_check_branch
          %225 = sbr.rel (%p223) target = $region28
        $region27: #{tpu_custom_call.1} parent=23 // pred_region
          %s226 = sand.u32 %s46, 1
          %s227 = scalar_lea.sflag [#allocation3], %s226
          %s228 = sand.u32 %s46, 1
          %s229 = smul.addr %s228, 8
          %s230 = scalar_lea.vmem [#allocation2], %s229
          %s232 = ssub.s32 128, 128
          %233 = vsyncadd %s227, %s232
          %s234 = sadd.s32 %s30, %s29
          %s235 = smul.addr %s234, 128
          %s236 = scalar_lea.hbm %s0, %s235
          %s238 = sshll.u32 %s230, 4
          %s239 = int_to_ptr.vmem [resolvable:$true] %s238
          %241 = dma.hbm_to_vmem [thread:$0]  %s236, 128, %s239, %s227
        $region28: #{tpu_custom_call.1} parent=23 // pred_fallthru
          _
      $region24: #{tpu_custom_call.1} parent=5 // pred_fallthru
        _
      %p242 = scmp.le.s32.totalorder 1, %s22
      %p243 = scmp.lt.s32.totalorder %s22, 3
      %p244 = pnand %p242, %p243
      %p245 = pneg %p244
      // Predicated region
      $region29: #{tpu_custom_call.1} parent=5 // pred_check
        _
      $region30: #{tpu_custom_call.1} parent=5 // pred_check_branch
        %247 = sbr.rel (%p244) target = $region32
      $region31: #{tpu_custom_call.1} parent=5 // pred_region
        %s248 = ssub.s32 %s22, 1
        %s249 = sand.u32 %s49, 1
        %s250 = scalar_lea.sflag [#allocation3], %s249
        %s251 = sand.u32 %s49, 1
        %s252 = smul.addr %s251, 8
        %s253 = scalar_lea.vmem [#allocation2], %s252
        // Predicated region
        $region33: #{tpu_custom_call.1} parent=31 // pred_check
          %p254 = pneg %p62
        $region34: #{tpu_custom_call.1} parent=31 // pred_check_branch
          %256 = sbr.rel (%p254) target = $region36
        $region35: #{tpu_custom_call.1} parent=31 // pred_region
          %257 = dma.done %s250, 128
        $region36: #{tpu_custom_call.1} parent=31 // pred_fallthru
          _
        // Predicated region
        $region37: #{tpu_custom_call.1} parent=31 // pred_check
          %p258 = pneg %p83
        $region38: #{tpu_custom_call.1} parent=31 // pred_check_branch
          %260 = sbr.rel (%p258) target = $region40
        $region39: #{tpu_custom_call.1} parent=31 // pred_region
          %261 = dma.done [#allocation6], 512
        $region40: #{tpu_custom_call.1} parent=31 // pred_fallthru
          _
        %s262 = sand.u32 %s49, 1
        %s263 = scalar_lea.sflag [#allocation3], %s262
        %s264 = sand.u32 %s49, 1
        %s265 = smul.addr %s264, 8
        %s266 = scalar_lea.vmem [#allocation2], %s265
        %p267 = pneg %p62
        %p268 = pneg %p59
        %p269 = pneg %p83
        %p270 = pneg %p80
        %p271 = pneg %p104
        %p272 = pneg %p101
        %p273 = pneg %p132
        %p274 = pneg %p129
        %s275 = sand.u32 %s119, 1
        %s276 = scalar_lea.sflag [#allocation4], %s275
        %s277 = sand.u32 %s119, 1
        %s278 = smul.addr %s277, 32
        %s279 = scalar_lea.vmem [#allocation7], %s278
        %p280 = pneg %p160
        %p281 = pneg %p157
        %s282 = sand.u32 %s27, 1
        %s283 = scalar_lea.sflag [#allocation9], %s282
        %s284 = sand.u32 %s147, 1
        %s285 = smul.addr %s284, 32
        %s286 = scalar_lea.vmem [#allocation8], %s285
        %p287 = pneg %p188
        %p288 = pneg %p185
        %s289 = sand.u32 %s27, 1
        %s290 = scalar_lea.sflag [#allocation9], %s289
        %s291 = sand.u32 %s175, 1
        %s292 = smul.addr %s291, 32
        %s293 = scalar_lea.vmem [#allocation10], %s292
        %v294 = vld [vmem:[%s253] sm:$0xff]
        %v295 = vld [vmem:[#allocation5] sm:$0xff]
        %v296 = vld [vmem:[#allocation5 + $0x8] sm:$0xff]
        %v297 = vld [vmem:[#allocation5 + $0x10] sm:$0xff]
        %v298 = vld [vmem:[#allocation5 + $0x18] sm:$0xff]
        %v299 = vld [vmem:[%s2] sm:$0x1]
        %v301 = vlaneseq
        %v302 = vshrl.u32 %v301, 7
        %v303 = vsub.s32 0, %v302
        %v304 = vrot.slane %v299, %v303
        %vm306 = vcmask 261120
        %v308 = vsel %vm306, %v294, 0
        %310 = vmatprep.subr.mxu0 0.0
        %311 = vmatpush1.msra.mxu0 %v295
        %312 = vmatprep.subr.mxu0 0.0
        %313 = vmatpush1.msra.mxu0 %v296
        %314 = vmatprep.subr.mxu0 0.0
        %315 = vmatpush1.msra.mxu0 %v297
        %316 = vmatprep.subr.mxu0 0.0
        %317 = vmatpush1.msra.mxu0 %v298
        %318 = vmatprep.subr.mxu0 0.0
        %319 = vmatpush1.msra.mxu0 0.0
        %320 = vmatprep.subr.mxu0 0.0
        %321 = vmatpush1.msra.mxu0 0.0
        %322 = vmatprep.subr.mxu0 0.0
        %323 = vmatpush1.msra.mxu0 0.0
        %324 = vmatprep.subr.mxu0 0.0
        %325 = vmatpush1.msra.mxu0 0.0
        %326 = vmatprep.subr.mxu0 0.0
        %327 = vmatpush1.msra.mxu0 0.0
        %328 = vmatprep.subr.mxu0 0.0
        %329 = vmatpush1.msra.mxu0 0.0
        %330 = vmatprep.subr.mxu0 0.0
        %331 = vmatpush1.msra.mxu0 0.0
        %332 = vmatprep.subr.mxu0 0.0
        %333 = vmatpush1.msra.mxu0 0.0
        %334 = vmatprep.subr.mxu0 0.0
        %335 = vmatpush1.msra.mxu0 0.0
        %336 = vmatprep.subr.mxu0 0.0
        %337 = vmatpush1.msra.mxu0 0.0
        %338 = vmatprep.subr.mxu0 0.0
        %339 = vmatpush1.msra.mxu0 0.0
        %340 = vmatprep.subr.mxu0 0.0
        %341 = vmatpush1.msra.mxu0 0.0
        %342 = vmatprep.subr.mxu0 0.0
        %343 = vmatpush1.msra.mxu0 0.0
        %344 = vmatprep.subr.mxu0 0.0
        %345 = vmatpush1.msra.mxu0 0.0
        %346 = vmatprep.subr.mxu0 0.0
        %347 = vmatpush1.msra.mxu0 0.0
        %348 = vmatprep.subr.mxu0 0.0
        %349 = vmatpush1.msra.mxu0 0.0
        %350 = vmatprep.subr.mxu0 0.0
        %351 = vmatpush1.msra.mxu0 0.0
        %352 = vmatprep.subr.mxu0 0.0
        %353 = vmatpush1.msra.mxu0 0.0
        %354 = vmatprep.subr.mxu0 0.0
        %355 = vmatpush1.msra.mxu0 0.0
        %356 = vmatprep.subr.mxu0 0.0
        %357 = vmatpush1.msra.mxu0 0.0
        %358 = vmatprep.subr.mxu0 0.0
        %359 = vmatpush1.msra.mxu0 0.0
        %360 = vmatprep.subr.mxu0 0.0
        %361 = vmatpush1.msra.mxu0 0.0
        %362 = vmatprep.subr.mxu0 0.0
        %363 = vmatpush1.msra.mxu0 0.0
        %364 = vmatprep.subr.mxu0 0.0
        %365 = vmatpush1.msra.mxu0 0.0
        %366 = vmatprep.subr.mxu0 0.0
        %367 = vmatpush1.msra.mxu0 0.0
        %368 = vmatprep.subr.mxu0 0.0
        %369 = vmatpush1.msra.mxu0 0.0
        %370 = vmatprep.subr.mxu0 0.0
        %371 = vmatpush1.msra.mxu0 0.0
        %372 = vmatprep.subr.mxu0 0.0
        %373 = vmatpush1.msra.mxu0 0.0
        %374 = vmatprep.mubr.f32.mxu0 0.0
        %375 = vmatmul.mubr.f32.gmra.mrb[0].mxu0 %v308
        %v376 = vpop.f32.mrb[0].mxu0
        %v377 = vadd.f32 %v304, %v376
        %v378 = vpop.f32.mrb[0].mxu0
        %379 = vdwg.mxu0
        %381 = vrot.lane.b32.xlu0 %v377, 120
        %v382 = vpop.permute.xlu0 %381
        %384 = vrot.lane.b32.xlu0 %v377, 112
        %v385 = vpop.permute.xlu0 %384
        %387 = vrot.lane.b32.xlu0 %v377, 104
        %v388 = vpop.permute.xlu0 %387
        %vm390 = vcmask 64512
        %391 = vst.msk [vmem:[%s279] sm:$0xff] %vm390, %v377
        %392 = vst.msk [vmem:[%s279 + $0x8] sm:$0xff] %vm390, %v382
        %393 = vst.msk [vmem:[%s279 + $0x10] sm:$0xff] %vm390, %v385
        %394 = vst.msk [vmem:[%s279 + $0x18] sm:$0xff] %vm390, %v388
        %395 = vrot.lane.b32.xlu0 %v377, 96
        %v396 = vpop.permute.xlu0 %395
        %397 = vrot.lane.b32.xlu0 %v382, 96
        %v398 = vpop.permute.xlu0 %397
        %399 = vrot.lane.b32.xlu0 %v385, 96
        %v400 = vpop.permute.xlu0 %399
        %401 = vrot.lane.b32.xlu0 %v388, 96
        %v402 = vpop.permute.xlu0 %401
        %407 = vst.msk [vmem:[%s286] sm:$0xff] %vm390, %v396
        %408 = vst.msk [vmem:[%s286 + $0x8] sm:$0xff] %vm390, %v398
        %409 = vst.msk [vmem:[%s286 + $0x10] sm:$0xff] %vm390, %v400
        %410 = vst.msk [vmem:[%s286 + $0x18] sm:$0xff] %vm390, %v402
        %411 = vrot.lane.b32.xlu0 %v377, 64
        %v412 = vpop.permute.xlu0 %411
        %413 = vrot.lane.b32.xlu0 %v382, 64
        %v414 = vpop.permute.xlu0 %413
        %415 = vrot.lane.b32.xlu0 %v385, 64
        %v416 = vpop.permute.xlu0 %415
        %417 = vrot.lane.b32.xlu0 %v388, 64
        %v418 = vpop.permute.xlu0 %417
        %423 = vst.msk [vmem:[%s293] sm:$0xff] %vm390, %v412
        %424 = vst.msk [vmem:[%s293 + $0x8] sm:$0xff] %vm390, %v414
        %425 = vst.msk [vmem:[%s293 + $0x10] sm:$0xff] %vm390, %v416
        %426 = vst.msk [vmem:[%s293 + $0x18] sm:$0xff] %vm390, %v418
        %s427 = sand.u32 %s119, 1
        %s428 = scalar_lea.sflag [#allocation4], %s427
        %s429 = sand.u32 %s119, 1
        %s430 = smul.addr %s429, 32
        %s431 = scalar_lea.vmem [#allocation7], %s430
        %s432 = sand.u32 %s27, 1
        %s433 = scalar_lea.sflag [#allocation9], %s432
        %s434 = sand.u32 %s147, 1
        %s435 = smul.addr %s434, 32
        %s436 = scalar_lea.vmem [#allocation8], %s435
        %s437 = sand.u32 %s27, 1
        %s438 = scalar_lea.sflag [#allocation9], %s437
        %s439 = sand.u32 %s175, 1
        %s440 = smul.addr %s439, 32
        %s441 = scalar_lea.vmem [#allocation10], %s440
        // Predicated region
        $region41: #{tpu_custom_call.1} parent=31 // pred_check
          %p442 = pneg %p129
        $region42: #{tpu_custom_call.1} parent=31 // pred_check_branch
          %444 = sbr.rel (%p442) target = $region44
        $region43: #{tpu_custom_call.1} parent=31 // pred_region
          %s446 = ssub.s32 512, 512
          %447 = vsyncadd %s428, %s446
          %s448 = smul.addr %s31, 4
          %s449 = sadd.s32 %s32, %s448
          %s450 = smul.addr %s449, 128
          %s451 = scalar_lea.hbm %s3, %s450
          %s452 = sshll.u32 %s431, 4
          %s453 = int_to_ptr.vmem [resolvable:$true] %s452
          %458 = dma.vmem_to_hbm [thread:$0]  %s453, 512, %s451, %s428, 128, 128, 8
        $region44: #{tpu_custom_call.1} parent=31 // pred_fallthru
          _
        // Predicated region
        $region45: #{tpu_custom_call.1} parent=31 // pred_check
          %p459 = pneg %p157
        $region46: #{tpu_custom_call.1} parent=31 // pred_check_branch
          %461 = sbr.rel (%p459) target = $region48
        $region47: #{tpu_custom_call.1} parent=31 // pred_region
          %s463 = ssub.s32 512, 512
          %464 = vsyncadd %s433, %s463
          %s465 = smul.addr %s31, 4
          %s466 = sadd.s32 %s32, %s465
          %s467 = smul.addr %s466, 128
          %s468 = scalar_lea.hbm %s4, %s467
          %s469 = sshll.u32 %s436, 4
          %s470 = int_to_ptr.vmem [resolvable:$true] %s469
          %475 = dma.vmem_to_hbm [thread:$0]  %s470, 512, %s468, %s433, 128, 128, 8
        $region48: #{tpu_custom_call.1} parent=31 // pred_fallthru
          _
        // Predicated region
        $region49: #{tpu_custom_call.1} parent=31 // pred_check
          %p476 = pneg %p185
        $region50: #{tpu_custom_call.1} parent=31 // pred_check_branch
          %478 = sbr.rel (%p476) target = $region52
        $region51: #{tpu_custom_call.1} parent=31 // pred_region
          %s480 = ssub.s32 512, 512
          %481 = vsyncadd %s438, %s480
          %s482 = smul.addr %s31, 4
          %s483 = sadd.s32 %s32, %s482
          %s484 = smul.addr %s483, 128
          %s485 = scalar_lea.hbm %s5, %s484
          %s486 = sshll.u32 %s441, 4
          %s487 = int_to_ptr.vmem [resolvable:$true] %s486
          %492 = dma.vmem_to_hbm [thread:$0]  %s487, 512, %s485, %s438, 128, 128, 8
        $region52: #{tpu_custom_call.1} parent=31 // pred_fallthru
          _
      $region32: #{tpu_custom_call.1} parent=5 // pred_fallthru
        _
      %p493 = scmp.le.s32.totalorder 2, %s22
      // Predicated region
      $region53: #{tpu_custom_call.1} parent=5 // pred_check
        %p494 = pneg %p493
      $region54: #{tpu_custom_call.1} parent=5 // pred_check_branch
        %496 = sbr.rel (%p494) target = $region56
      $region55: #{tpu_custom_call.1} parent=5 // pred_region
        %s497 = ssub.s32 %s22, 2
        // Predicated region
        $region57: #{tpu_custom_call.1} parent=55 // pred_check
          %p498 = pneg %p135
        $region58: #{tpu_custom_call.1} parent=55 // pred_check_branch
          %500 = sbr.rel (%p498) target = $region60
        $region59: #{tpu_custom_call.1} parent=55 // pred_region
          %s501 = sand.u32 %s120, 1
          %s502 = scalar_lea.sflag [#allocation4], %s501
          %s503 = sand.u32 %s120, 1
          %s504 = smul.addr %s503, 32
          %s505 = scalar_lea.vmem [#allocation7], %s504
          %506 = dma.done %s502, 512
        $region60: #{tpu_custom_call.1} parent=55 // pred_fallthru
          _
        // Predicated region
        $region61: #{tpu_custom_call.1} parent=55 // pred_check
          %p507 = pneg %p163
        $region62: #{tpu_custom_call.1} parent=55 // pred_check_branch
          %509 = sbr.rel (%p507) target = $region64
        $region63: #{tpu_custom_call.1} parent=55 // pred_region
          %s510 = sand.u32 %s28, 1
          %s511 = scalar_lea.sflag [#allocation9], %s510
          %s512 = sand.u32 %s148, 1
          %s513 = smul.addr %s512, 32
          %s514 = scalar_lea.vmem [#allocation8], %s513
          %515 = dma.done %s511, 512
        $region64: #{tpu_custom_call.1} parent=55 // pred_fallthru
          _
        // Predicated region
        $region65: #{tpu_custom_call.1} parent=55 // pred_check
          %p516 = pneg %p191
        $region66: #{tpu_custom_call.1} parent=55 // pred_check_branch
          %518 = sbr.rel (%p516) target = $region68
        $region67: #{tpu_custom_call.1} parent=55 // pred_region
          %s519 = sand.u32 %s28, 1
          %s520 = scalar_lea.sflag [#allocation9], %s519
          %s521 = sand.u32 %s176, 1
          %s522 = smul.addr %s521, 32
          %s523 = scalar_lea.vmem [#allocation10], %s522
          %524 = dma.done %s520, 512
        $region68: #{tpu_custom_call.1} parent=55 // pred_fallthru
          _
      $region56: #{tpu_custom_call.1} parent=5 // pred_fallthru
        _
    $region6: #{tpu_custom_call.1} parent=1 // loop_footer
      %s26 = sadd.s32 1, %s22
    $region7: #{tpu_custom_call.1} parent=1 // loop_footer_branch
      %21 = sbr.rel target = $region3
    $region8: #{tpu_custom_call.1} parent=1 // loop_exit
      _
    %525 = vsyncpa [#allocation3], 1
    %s526 = scalar_lea.sflag [#allocation3], 1
    %527 = vsyncpa %s526, 1
    %528 = vsyncpa [#allocation6], 1
    %529 = vsyncpa [#allocation4], 1
    %s530 = scalar_lea.sflag [#allocation4], 1
    %531 = vsyncpa %s530, 1
    %532 = vsyncpa [#allocation9], 1
    %s533 = scalar_lea.sflag [#allocation9], 1
    %534 = vsyncpa %s533, 1

</llo_original>
